<compile_context>
chip_gen: v7x
topology: tpu7x:2x2x1
jax: 0.10.0
libtpu: 0.0.40
codegen_flags: <defaults>
</compile_context>

<pallas_src>
import functools

import jax
import jax.numpy as jnp
from jax.experimental import pallas as pl
from jax.experimental.pallas import tpu as pltpu


def _pos_add_kernel(x_ref, pos_ref, o_ref):
    # x_ref : (C, HW_tile)   input block for one batch element
    # pos_ref: (C, HW_tile)  positional embedding (batch-invariant, same dtype as x)
    # o_ref : (C, HW_tile)
    o_ref[...] = x_ref[...] + pos_ref[...]


def make_position_grid(spatial_shape):
    """Build the (H, W, 4) position grid exactly like the PyTorch module."""
    axes = [jnp.linspace(0.0, 1.0, d, dtype=jnp.float32) for d in spatial_shape]
    g = jnp.stack(jnp.meshgrid(*axes, indexing="ij"), axis=-1)   # (H, W, len(shape))
    g = jnp.concatenate([g, 1.0 - g], axis=-1)                   # (H, W, 2*len(shape))
    return g


@functools.lru_cache(maxsize=1)
def _tpu_tuning():
    """Per-generation (hw-tile byte target, scoped-VMEM limit)."""
    target_bytes = 4 << 20        # v6e / v7x: bigger tiles amortize ~0.35us/step overhead
    vmem_limit = 40 << 20         # above 32 MiB scoped default, below v7x 64 MiB physical
    try:
        kind = jax.devices()[0].device_kind.lower()
        if "v5" in kind:          # v5e: 16 MiB scoped default, 820 GB/s HBM
            target_bytes = 2 << 20
            vmem_limit = 24 << 20
    except Exception:
        pass
    return target_bytes, vmem_limit


def _pick_hw_tile(C, HW, itemsize, target_bytes):
    """Largest lane-dense (128-multiple) HW tile with block size ~<= target_bytes."""
    if HW <= 128:
        return HW                               # block dim == full array dim is legal
    tile = (target_bytes // max(1, C * itemsize)) // 128 * 128
    tile = min(tile, (HW // 128) * 128)         # 128-multiple; last grid block may be
    return int(max(128, tile))                  # partial (Pallas masks the store)


@jax.jit
def position_embedding(x_nchw, grid_hw4, weight, bias):
    """x_nchw: (N, C, H, W). weight: (C, 4), bias: (C,). Returns (N, C, H, W)."""
    N, C, H, W = x_nchw.shape
    HW = H * W

    # Free reshape (no transpose): channels-first, HW on the lane axis.
    x_k = x_nchw.reshape(N, C, HW)

    # Batch-invariant positional embedding, computed once in f32 then stored in
    # x's dtype (halves pos HBM/VMEM traffic for bf16 inputs):
    #   pos[c, hw] = sum_f weight[c, f] * grid[hw, f] + bias[c]
    grid_k = grid_hw4.reshape(HW, -1).astype(jnp.float32)             # (HW, 4)
    pos = (jnp.dot(weight.astype(jnp.float32), grid_k.T,
                   preferred_element_type=jnp.float32)
           + bias.astype(jnp.float32)[:, None])                       # (C, HW) f32
    pos = pos.astype(x_k.dtype)

    target_bytes, vmem_limit = _tpu_tuning()
    hw_tile = _pick_hw_tile(C, HW, x_k.dtype.itemsize, target_bytes)
    n_hw = pl.cdiv(HW, hw_tile)

    cost = pl.CostEstimate(
        flops=N * C * HW,
        transcendentals=0,
        bytes_accessed=2 * N * C * HW * x_k.dtype.itemsize
        + C * HW * pos.dtype.itemsize,
    )

    out_k = pl.pallas_call(
        _pos_add_kernel,
        out_shape=jax.ShapeDtypeStruct((N, C, HW), x_k.dtype),
        grid_spec=pltpu.PrefetchScalarGridSpec(
            num_scalar_prefetch=0,
            # n_hw OUTER, batch INNER: pos block index (0, j) is constant over the
            # inner batch steps, so its DMA is skipped N-1 times out of N.
            grid=(n_hw, N),
            in_specs=[
                pl.BlockSpec((pl.Squeezed(), C, hw_tile), lambda j, n: (n, 0, j)),
                pl.BlockSpec((C, hw_tile), lambda j, n: (0, j)),
            ],
            out_specs=pl.BlockSpec((pl.Squeezed(), C, hw_tile),
                                   lambda j, n: (n, 0, j)),
        ),
        compiler_params=pltpu.CompilerParams(
            dimension_semantics=("parallel", "parallel"),
            vmem_limit_bytes=vmem_limit),
        cost_estimate=cost,
    )(x_k, pos)

    return out_k.reshape(N, C, H, W)


if __name__ == "__main__":
    # Small, deterministic setup.
    N, C, H, W = 2, 32, 16, 16
    spatial_shape = (H, W)
    in_feat = 2 * len(spatial_shape)  # 4

    key = jax.random.PRNGKey(0)
    kx, kw, kb = jax.random.split(key, 3)

    x = jax.random.normal(kx, (N, C, H, W), dtype=jnp.float32)

    # nn.Linear(4, C) style init (uniform in +/- 1/sqrt(in_feat)), deterministic.
    bound = 1.0 / jnp.sqrt(float(in_feat))
    weight = jax.random.uniform(kw, (C, in_feat), jnp.float32, -bound, bound)  # (C, 4)
    bias = jax.random.uniform(kb, (C,), jnp.float32, -bound, bound)

    grid = make_position_grid(spatial_shape)          # (H, W, 4)

    out = position_embedding(x, grid, weight, bias)
    out = jax.block_until_ready(out)

    # Pure-JAX reference for sanity (same math as the PyTorch forward).
    pos_ref = jnp.einsum("hwf,cf->chw", grid, weight) + bias[:, None, None]
    ref = x + pos_ref[None]
    assert out.shape == (N, C, H, W)
    assert jnp.allclose(out, ref, atol=1e-5, rtol=1e-5)

    print("KERNEL_OK")
</pallas_src>

<mosaic_0001>
module attributes {stable_mosaic.version = 11 : i64} {
  func.func @_pos_add_kernel(%arg0: i32, %arg1: i32, %arg2: memref<1x32x256xf32, #tpu.memory_space<vmem>>, %arg3: memref<32x256xf32, #tpu.memory_space<vmem>>, %arg4: memref<1x32x256xf32, #tpu.memory_space<vmem>>) attributes {dimension_semantics = [#tpu.dimension_semantics<parallel>, #tpu.dimension_semantics<parallel>], iteration_bounds = array<i64: 1, 2>, scalar_prefetch = 0 : i64, scratch_operands = 0 : i64, tpu.core_type = #tpu.core_type<tc>, window_params = [{transform_indices = @transform_0, window_bounds = array<i64: 1, 32, 256>}, {transform_indices = @transform_1, window_bounds = array<i64: 32, 256>}, {transform_indices = @transform_2, window_bounds = array<i64: 1, 32, 256>}]} {
    %c0 = arith.constant 0 : index
    %c0_0 = arith.constant 0 : index
    %c0_1 = arith.constant 0 : index
    %0 = vector.load %arg2[%c0, %c0_0, %c0_1] : memref<1x32x256xf32, #tpu.memory_space<vmem>>, vector<1x32x256xf32>
    %1 = vector.shape_cast %0 : vector<1x32x256xf32> to vector<32x256xf32>
    %c0_2 = arith.constant 0 : index
    %c0_3 = arith.constant 0 : index
    %2 = vector.load %arg3[%c0_2, %c0_3] : memref<32x256xf32, #tpu.memory_space<vmem>>, vector<32x256xf32>
    %3 = arith.addf %1, %2 : vector<32x256xf32>
    %c0_4 = arith.constant 0 : index
    %c0_5 = arith.constant 0 : index
    %c0_6 = arith.constant 0 : index
    %4 = vector.load %arg4[%c0_4, %c0_5, %c0_6] : memref<1x32x256xf32, #tpu.memory_space<vmem>>, vector<1x32x256xf32>
    %5 = vector.shape_cast %4 : vector<1x32x256xf32> to vector<32x256xf32>
    %6 = vector.shape_cast %3 : vector<32x256xf32> to vector<1x32x256xf32>
    tpu.vector_store %arg4[%c0_4, %c0_5, %c0_6], %6 {strides = array<i32>} : memref<1x32x256xf32, #tpu.memory_space<vmem>>, vector<1x32x256xf32>,
    return
  }
  func.func @transform_0(%arg0: i32, %arg1: i32) -> (i32, i32, i32) {
    %c0_i32 = arith.constant 0 : i32
    %c0_i32_0 = arith.constant 0 : i32
    return %arg1, %c0_i32, %arg0 : i32, i32, i32
  }
  func.func @transform_1(%arg0: i32, %arg1: i32) -> (i32, i32) {
    %c0_i32 = arith.constant 0 : i32
    %c0_i32_0 = arith.constant 0 : i32
    return %c0_i32, %arg0 : i32, i32
  }
  func.func @transform_2(%arg0: i32, %arg1: i32) -> (i32, i32, i32) {
    %c0_i32 = arith.constant 0 : i32
    %c0_i32_0 = arith.constant 0 : i32
    return %arg1, %c0_i32, %arg0 : i32, i32, i32
  }
}

</mosaic_0001>

<llo_original>
// kernel: position_embedding.1
$region0: #{position_embedding.1}
  #allocation0 [shape = 'u32[]', space=smem, size = 0x4, offset = 0x4, fixed_abs, tag = 'smem constant byte address 0x4 - core index']
  #allocation1 [shape = 'u32[144,128]{1,0:T(1,128)}', space=vmem, size = 0x12000, scoped, tag = 'internal scratch']
  %s0 = inlined_call_operand.vmem [shape: f32[2,32,256], index: 0, kind: input, shape index: {}]
  %s1 = inlined_call_operand.vmem [shape: f32[32,256], index: 1, kind: input, shape index: {}]
  %s2 = inlined_call_operand.vmem [shape: f32[2,32,256], index: 2, kind: output, shape index: {}]
  %s3 = sld [smem:[#allocation0]]
  $region41: #{position_embedding.1} parent=0
    _
  %s5 = ssub.s32 1, %s3
  %s6 = scalar_select 0, %s5, %s3
  loop: start=0, step=1, limit=4
  $region2: #{position_embedding.1} parent=0 // loop_pre_header
    _
  $region3: #{position_embedding.1} parent=0 // loop_header
    %s8 = sphi 0, %s12
    %p9 = scmp.ge.s32.totalorder %s8, 4
    %s15 = sphi 0, %s27
    %s16 = sphi 0, %s23
    %s17 = sphi 0, %s15
    %s18 = sphi 0, %s16
    %s19 = sphi 0, %s17
    %s20 = sphi 0, %s18
    %s32 = sphi 0, %s34
    %s35 = sphi 0, %s32
    %s36 = sphi 0, %s35
    %s52 = sphi 0, %s36
    %s58 = sphi 0, %s60
    %s61 = sphi 0, %s58
    %s62 = sphi 0, %s61
    %s78 = sphi 0, %s62
    %s86 = sphi 0, %s88
    %s89 = sphi 0, %s86
    %s90 = sphi 0, %s89
    %s106 = sphi 0, %s90
  $region4: #{position_embedding.1} parent=0 // loop_header_branch
    %11 = sbr.rel (%p9) target = $region8
  $region5: #{position_embedding.1} parent=0 // loop_body
    %s13 = ssub.s32 %s8, 1
    %s14 = ssub.s32 %s8, 2
    %s21 = sadd.s32 1, %s16
    %p22 = scmp.ge.s32.totalorder %s21, 2
    %s23 = scalar_select %p22, 0, %s21
    %s24 = sadd.s32 1, %s15
    %s25 = scalar_select %p22, %s24, %s15
    %p26 = scmp.ge.s32.totalorder %s25, 1
    %s27 = scalar_select %p26, 0, %s25
    %s28 = ssub.s32 %s16, %s23
    %s29 = ssub.s32 %s15, %s27
    %s30 = sor.u32 %s28, %s29
    %p31 = scmp.eq.s32.totalorder %s30, 0
    %s33 = sadd.s32 %s32, 1
    %s34 = scalar_select %p31, %s32, %s33
    %p37 = pneg %p31
    %p38 = scmp.eq.s32.totalorder %s8, 1
    %p39 = por %p37, %p38
    %p40 = scmp.ne.s32.totalorder %s32, %s35
    %p41 = scmp.eq.s32.totalorder %s8, 0
    %p42 = por %p40, %p41
    %p43 = scmp.ne.s32.totalorder %s32, %s35
    %p44 = scmp.eq.s32.totalorder %s13, 1
    %p45 = por %p43, %p44
    %p46 = scmp.ne.s32.totalorder %s35, %s36
    %p47 = scmp.eq.s32.totalorder %s13, 0
    %p48 = por %p46, %p47
    %p49 = scmp.ne.s32.totalorder %s35, %s36
    %p50 = scmp.eq.s32.totalorder %s14, 1
    %p51 = por %p49, %p50
    %p53 = scmp.ne.s32.totalorder %s36, %s52
    %p54 = scmp.eq.s32.totalorder %s14, 0
    %p55 = por %p53, %p54
    %s56 = ssub.s32 %s15, %s27
    %p57 = scmp.eq.s32.totalorder %s56, 0
    %s59 = sadd.s32 %s58, 1
    %s60 = scalar_select %p57, %s58, %s59
    %p63 = pneg %p57
    %p64 = scmp.eq.s32.totalorder %s8, 1
    %p65 = por %p63, %p64
    %p66 = scmp.ne.s32.totalorder %s58, %s61
    %p67 = scmp.eq.s32.totalorder %s8, 0
    %p68 = por %p66, %p67
    %p69 = scmp.ne.s32.totalorder %s58, %s61
    %p70 = scmp.eq.s32.totalorder %s13, 1
    %p71 = por %p69, %p70
    %p72 = scmp.ne.s32.totalorder %s61, %s62
    %p73 = scmp.eq.s32.totalorder %s13, 0
    %p74 = por %p72, %p73
    %p75 = scmp.ne.s32.totalorder %s61, %s62
    %p76 = scmp.eq.s32.totalorder %s14, 1
    %p77 = por %p75, %p76
    %p79 = scmp.ne.s32.totalorder %s62, %s78
    %p80 = scmp.eq.s32.totalorder %s14, 0
    %p81 = por %p79, %p80
    %s82 = ssub.s32 %s16, %s23
    %s83 = ssub.s32 %s15, %s27
    %s84 = sor.u32 %s82, %s83
    %p85 = scmp.eq.s32.totalorder %s84, 0
    %s87 = sadd.s32 %s86, 1
    %s88 = scalar_select %p85, %s86, %s87
    %p91 = pneg %p85
    %p92 = scmp.eq.s32.totalorder %s8, 1
    %p93 = por %p91, %p92
    %p94 = scmp.ne.s32.totalorder %s86, %s89
    %p95 = scmp.eq.s32.totalorder %s8, 0
    %p96 = por %p94, %p95
    %p97 = scmp.ne.s32.totalorder %s86, %s89
    %p98 = scmp.eq.s32.totalorder %s13, 1
    %p99 = por %p97, %p98
    %p100 = scmp.ne.s32.totalorder %s89, %s90
    %p101 = scmp.eq.s32.totalorder %s13, 0
    %p102 = por %p100, %p101
    %p103 = scmp.ne.s32.totalorder %s89, %s90
    %p104 = scmp.eq.s32.totalorder %s14, 1
    %p105 = por %p103, %p104
    %p107 = scmp.ne.s32.totalorder %s90, %s106
    %p108 = scmp.eq.s32.totalorder %s14, 0
    %p109 = por %p107, %p108
    %p110 = scmp.le.s32.totalorder 1, %s8
    %p111 = scmp.lt.s32.totalorder %s8, 3
    %p112 = pnand %p110, %p111
    %p113 = pneg %p112
    // Predicated region
    $region9: #{position_embedding.1} parent=5 // pred_check
      _
    $region10: #{position_embedding.1} parent=5 // pred_check_branch
      %115 = sbr.rel (%p112) target = $region12
    $region11: #{position_embedding.1} parent=5 // pred_region
      %s116 = ssub.s32 %s8, 1
      // Predicated region
      $region13: #{position_embedding.1} parent=11 // pred_check
        %p117 = pneg %p74
      $region14: #{position_embedding.1} parent=11 // pred_check_branch
        %119 = sbr.rel (%p117) target = $region16
      $region15: #{position_embedding.1} parent=11 // pred_region
        %s120 = smul.u32 2, %s17
        %p121 = scmp.lt.s32.totalorder %s120, 1
        %s122 = scalar_select %p121, %s120, 1
        %s123 = smul.addr %s122, 8
        %s124 = scalar_lea.vmem %s1, %s123
        %s125 = smul.u32 2, %s17
      $region16: #{position_embedding.1} parent=11 // pred_fallthru
        _
    $region12: #{position_embedding.1} parent=5 // pred_fallthru
      _
    %p126 = scmp.lt.s32.totalorder %s8, 2
    // Predicated region
    $region17: #{position_embedding.1} parent=5 // pred_check
      %p127 = pneg %p126
    $region18: #{position_embedding.1} parent=5 // pred_check_branch
      %129 = sbr.rel (%p127) target = $region20
    $region19: #{position_embedding.1} parent=5 // pred_region
      // Predicated region
      $region21: #{position_embedding.1} parent=19 // pred_check
        %p130 = pneg %p42
      $region22: #{position_embedding.1} parent=19 // pred_check_branch
        %132 = sbr.rel (%p130) target = $region24
      $region23: #{position_embedding.1} parent=19 // pred_region
        %s133 = smul.u32 2, %s15
        %p134 = scmp.lt.s32.totalorder %s16, 1
        %s135 = scalar_select %p134, %s16, 1
        %p136 = scmp.lt.s32.totalorder %s133, 1
        %s137 = scalar_select %p136, %s133, 1
        %s138 = smul.addr %s135, 8
        %s139 = sadd.s32 %s137, %s138
        %s140 = smul.addr %s139, 8
        %s141 = scalar_lea.vmem %s0, %s140
        %s142 = smul.u32 2, %s15
      $region24: #{position_embedding.1} parent=19 // pred_fallthru
        _
    $region20: #{position_embedding.1} parent=5 // pred_fallthru
      _
    %p143 = scmp.le.s32.totalorder 1, %s8
    %p144 = scmp.lt.s32.totalorder %s8, 3
    %p145 = pnand %p143, %p144
    %p146 = pneg %p145
    // Predicated region
    $region25: #{position_embedding.1} parent=5 // pred_check
      _
    $region26: #{position_embedding.1} parent=5 // pred_check_branch
      %148 = sbr.rel (%p145) target = $region28
    $region27: #{position_embedding.1} parent=5 // pred_region
      %s149 = ssub.s32 %s8, 1
      %s150 = smul.u32 2, %s17
      %p151 = scmp.lt.s32.totalorder %s18, 1
      %s152 = scalar_select %p151, %s18, 1
      %p153 = scmp.lt.s32.totalorder %s150, 1
      %s154 = scalar_select %p153, %s150, 1
      %s155 = smul.addr %s152, 8
      %s156 = sadd.s32 %s154, %s155
      %s157 = smul.addr %s156, 8
      %s158 = scalar_lea.vmem %s0, %s157
      %p159 = pneg %p48
      %p160 = pneg %p45
      %s161 = smul.u32 2, %s17
      %p162 = scmp.lt.s32.totalorder %s161, 1
      %s163 = scalar_select %p162, %s161, 1
      %s164 = smul.addr %s163, 8
      %s165 = scalar_lea.vmem %s1, %s164
      %p166 = pneg %p74
      %p167 = pneg %p71
      %p168 = pneg %p102
      %p169 = pneg %p99
      %s170 = smul.u32 2, %s17
      %p171 = scmp.lt.s32.totalorder %s18, 1
      %s172 = scalar_select %p171, %s18, 1
      %p173 = scmp.lt.s32.totalorder %s170, 1
      %s174 = scalar_select %p173, %s170, 1
      %s175 = smul.addr %s172, 8
      %s176 = sadd.s32 %s174, %s175
      %s177 = smul.addr %s176, 8
      %s178 = scalar_lea.vmem %s2, %s177
      %s179 = smul.u32 2, %s17
      %p180 = scmp.lt.s32.totalorder %s18, 1
      %s181 = scalar_select %p180, %s18, 1
      %p182 = scmp.lt.s32.totalorder %s179, 1
      %s183 = scalar_select %p182, %s179, 1
      %s184 = smul.addr %s181, 8
      %s185 = sadd.s32 %s183, %s184
      %s186 = smul.addr %s185, 8
      %s187 = scalar_lea.vmem %s0, %s186
      %s188 = smul.u32 2, %s17
      %s189 = smul.u32 2, %s17
      %p190 = scmp.lt.s32.totalorder %s189, 1
      %s191 = scalar_select %p190, %s189, 1
      %s192 = smul.addr %s191, 8
      %s193 = scalar_lea.vmem %s1, %s192
      %s194 = smul.u32 2, %s17
      %s195 = smul.u32 2, %s17
      %p196 = scmp.lt.s32.totalorder %s18, 1
      %s197 = scalar_select %p196, %s18, 1
      %p198 = scmp.lt.s32.totalorder %s195, 1
      %s199 = scalar_select %p198, %s195, 1
      %s200 = smul.addr %s197, 8
      %s201 = sadd.s32 %s199, %s200
      %s202 = smul.addr %s201, 8
      %s203 = scalar_lea.vmem %s2, %s202
      %s204 = smul.u32 2, %s17
      %v205 = vld [vmem:[%s187] sm:$0xff]
      %v206 = vld [vmem:[%s187 + $0x8] sm:$0xff]
      %v207 = vld [vmem:[%s187 + $0x10] sm:$0xff]
      %v208 = vld [vmem:[%s187 + $0x18] sm:$0xff]
      %v209 = vld [vmem:[%s187 + $0x20] sm:$0xff]
      %v210 = vld [vmem:[%s187 + $0x28] sm:$0xff]
      %v211 = vld [vmem:[%s187 + $0x30] sm:$0xff]
      %v212 = vld [vmem:[%s187 + $0x38] sm:$0xff]
      %v213 = vld [vmem:[%s193] sm:$0xff]
      %v214 = vld [vmem:[%s193 + $0x8] sm:$0xff]
      %v215 = vld [vmem:[%s193 + $0x10] sm:$0xff]
      %v216 = vld [vmem:[%s193 + $0x18] sm:$0xff]
      %v217 = vld [vmem:[%s193 + $0x20] sm:$0xff]
      %v218 = vld [vmem:[%s193 + $0x28] sm:$0xff]
      %v219 = vld [vmem:[%s193 + $0x30] sm:$0xff]
      %v220 = vld [vmem:[%s193 + $0x38] sm:$0xff]
      %v221 = vadd.f32 %v205, %v213
      %v222 = vadd.f32 %v206, %v214
      %v223 = vadd.f32 %v207, %v215
      %v224 = vadd.f32 %v208, %v216
      %v225 = vadd.f32 %v209, %v217
      %v226 = vadd.f32 %v210, %v218
      %v227 = vadd.f32 %v211, %v219
      %v228 = vadd.f32 %v212, %v220
      %229 = vst [vmem:[%s203] sm:$0xff] %v221
      %230 = vst [vmem:[%s203 + $0x8] sm:$0xff] %v222
      %231 = vst [vmem:[%s203 + $0x10] sm:$0xff] %v223
      %232 = vst [vmem:[%s203 + $0x18] sm:$0xff] %v224
      %233 = vst [vmem:[%s203 + $0x20] sm:$0xff] %v225
      %234 = vst [vmem:[%s203 + $0x28] sm:$0xff] %v226
      %235 = vst [vmem:[%s203 + $0x30] sm:$0xff] %v227
      %236 = vst [vmem:[%s203 + $0x38] sm:$0xff] %v228
      %s237 = smul.u32 2, %s17
      %p238 = scmp.lt.s32.totalorder %s18, 1
      %s239 = scalar_select %p238, %s18, 1
      %p240 = scmp.lt.s32.totalorder %s237, 1
      %s241 = scalar_select %p240, %s237, 1
      %s242 = smul.addr %s239, 8
      %s243 = sadd.s32 %s241, %s242
      %s244 = smul.addr %s243, 8
      %s245 = scalar_lea.vmem %s2, %s244
      // Predicated region
      $region29: #{position_embedding.1} parent=27 // pred_check
        %p246 = pneg %p99
      $region30: #{position_embedding.1} parent=27 // pred_check_branch
        %248 = sbr.rel (%p246) target = $region32
      $region31: #{position_embedding.1} parent=27 // pred_region
        %s249 = smul.u32 2, %s17
      $region32: #{position_embedding.1} parent=27 // pred_fallthru
        _
    $region28: #{position_embedding.1} parent=5 // pred_fallthru
      _
    %p250 = scmp.le.s32.totalorder 2, %s8
    // Predicated region
    $region33: #{position_embedding.1} parent=5 // pred_check
      %p251 = pneg %p250
    $region34: #{position_embedding.1} parent=5 // pred_check_branch
      %253 = sbr.rel (%p251) target = $region36
    $region35: #{position_embedding.1} parent=5 // pred_region
      %s254 = ssub.s32 %s8, 2
      // Predicated region
      $region37: #{position_embedding.1} parent=35 // pred_check
        %p255 = pneg %p105
      $region38: #{position_embedding.1} parent=35 // pred_check_branch
        %257 = sbr.rel (%p255) target = $region40
      $region39: #{position_embedding.1} parent=35 // pred_region
        %s258 = smul.u32 2, %s19
        %p259 = scmp.lt.s32.totalorder %s20, 1
        %s260 = scalar_select %p259, %s20, 1
        %p261 = scmp.lt.s32.totalorder %s258, 1
        %s262 = scalar_select %p261, %s258, 1
        %s263 = smul.addr %s260, 8
        %s264 = sadd.s32 %s262, %s263
        %s265 = smul.addr %s264, 8
        %s266 = scalar_lea.vmem %s2, %s265
      $region40: #{position_embedding.1} parent=35 // pred_fallthru
        _
    $region36: #{position_embedding.1} parent=5 // pred_fallthru
      _
  $region6: #{position_embedding.1} parent=0 // loop_footer
    %s12 = sadd.s32 1, %s8
  $region7: #{position_embedding.1} parent=0 // loop_footer_branch
    %7 = sbr.rel target = $region3
  $region8: #{position_embedding.1} parent=0 // loop_exit
    _

</llo_original>
